<compile_context>
chip_gen: v5e
topology: v5e:2x2
jax: 0.10.0
libtpu: 0.0.40
codegen_flags: <defaults>
</compile_context>

<pallas_src>
import functools

import jax
import jax.numpy as jnp
from jax.experimental import pallas as pl
from jax.experimental.pallas import tpu as pltpu

NUM_CLASSES = 10
KERNEL_SIZE = 20
CONV_OUT_LEN = 64                      # flattened conv features feeding fc_1
SEQ_LEN = CONV_OUT_LEN * KERNEL_SIZE   # 1280 (input length implied by fc_1)
HIDDEN = 120                           # fc_1 width
HIDDEN_PAD = 128                       # lane-dense hidden width
OUT_PAD = 128                          # lane-dense logits width


def _round_up(x, m):
    return (x + m - 1) // m * m


def lenet1d_kernel(x_ref, wf_ref, bf_ref, w3_ref, b3_ref, out_ref):
    # x_ref  : (TB, 1280)   bf16  -- flat input rows (conv fused into Wf)
    # wf_ref : (1280, 128)  bf16  -- fused conv+fc_1 weight (hidden padded)
    # bf_ref : (1, 128)     f32   -- fused conv+fc_1 bias
    # w3_ref : (128, 128)   bf16  -- fc_3 weight (rows/cols zero-padded)
    # b3_ref : (1, 128)     f32   -- fc_3 bias (zero-padded)
    # out_ref: (TB, 128)    f32   -- padded logits (cols 10: stay zero)
    h = jnp.dot(x_ref[...], wf_ref[...], preferred_element_type=jnp.float32)
    h = jnp.maximum(h + bf_ref[...], 0.0)                 # f32 bias + ReLU (VPU)
    out = jnp.dot(h.astype(w3_ref.dtype), w3_ref[...],
                  preferred_element_type=jnp.float32)
    out_ref[...] = out + b3_ref[...]                      # full-lane store


def _prepare_fused_params(params, compute_dtype=jnp.bfloat16):
    wc, bc, w1, b1, w3, b3 = params
    # conv[p] = sum_k x[p*20+k]*wc[k] + bc ;  h = conv @ w1 + b1
    # =>  h = x_flat @ Wf + (bc * sum_p w1[p, :] + b1)
    #     with Wf[p*20+k, :] = wc[k] * w1[p, :]
    wf = (w1[:, None, :] * wc[0][None, :, None]).reshape(SEQ_LEN, HIDDEN)
    bf = bc[0, 0] * jnp.sum(w1, axis=0) + b1[0]                       # (120,)
    # Zero-pad to lane-dense widths (padding contributes exactly 0).
    wf = jnp.pad(wf, ((0, 0), (0, HIDDEN_PAD - HIDDEN)))
    bf = jnp.pad(bf, (0, HIDDEN_PAD - HIDDEN))[None, :]
    w3p = jnp.pad(w3, ((0, HIDDEN_PAD - HIDDEN), (0, OUT_PAD - NUM_CLASSES)))
    b3p = jnp.pad(b3[0], (0, OUT_PAD - NUM_CLASSES))[None, :]
    return (wf.astype(compute_dtype), bf.astype(jnp.float32),
            w3p.astype(compute_dtype), b3p.astype(jnp.float32))


@functools.partial(jax.jit, static_argnames=("tb",))
def oned_lenet_forward(x, params, *, tb=512):
    """x: (B, 1, SEQ_LEN) float32 (NCL layout, like PyTorch Conv1d)."""
    B = x.shape[0]
    assert x.shape == (B, 1, SEQ_LEN)

    wf, bf, w3p, b3p = _prepare_fused_params(params)
    x_flat = x.reshape(B, SEQ_LEN).astype(wf.dtype)       # bf16, lane-dense K

    # Batch tile: multiple of 8 sublanes, capped at `tb`; pad B to a whole
    # number of tiles so every block is full (no masked partial stores).
    TB = min(tb, _round_up(B, 8))
    B_pad = _round_up(B, TB)
    if B_pad != B:
        x_flat = jnp.pad(x_flat, ((0, B_pad - B), (0, 0)))
    grid = (B_pad // TB,)

    cost = pl.CostEstimate(
        flops=2 * B_pad * (SEQ_LEN * HIDDEN_PAD + HIDDEN_PAD * OUT_PAD),
        transcendentals=0,
        bytes_accessed=(B_pad * SEQ_LEN * 2            # x (bf16)
                        + SEQ_LEN * HIDDEN_PAD * 2     # fused weight (bf16)
                        + HIDDEN_PAD * OUT_PAD * 2     # fc_3 weight (bf16)
                        + (HIDDEN_PAD + OUT_PAD) * 4   # biases (f32)
                        + B_pad * OUT_PAD * 4),        # output (f32)
    )

    out = pl.pallas_call(
        lenet1d_kernel,
        out_shape=jax.ShapeDtypeStruct((B_pad, OUT_PAD), jnp.float32),
        grid=grid,
        in_specs=[
            pl.BlockSpec((TB, SEQ_LEN), lambda i: (i, 0)),          # x tile
            pl.BlockSpec((SEQ_LEN, HIDDEN_PAD), lambda i: (0, 0)),  # Wfused
            pl.BlockSpec((1, HIDDEN_PAD), lambda i: (0, 0)),        # b_fused
            pl.BlockSpec((HIDDEN_PAD, OUT_PAD), lambda i: (0, 0)),  # w3 (pad)
            pl.BlockSpec((1, OUT_PAD), lambda i: (0, 0)),           # b3 (pad)
        ],
        out_specs=pl.BlockSpec((TB, OUT_PAD), lambda i: (i, 0)),
        compiler_params=pltpu.CompilerParams(
            dimension_semantics=("parallel",)),
        cost_estimate=cost,
    )(x_flat, wf, bf, w3p, b3p)

    return out[:B, :NUM_CLASSES]


def init_params(key):
    """Deterministic PyTorch-style uniform init (U(-1/sqrt(fan_in), +...))."""
    ks = jax.random.split(key, 6)

    def u(k, shape, fan_in):
        bound = 1.0 / jnp.sqrt(jnp.float32(fan_in))
        return jax.random.uniform(k, shape, jnp.float32, -bound, bound)

    wc = u(ks[0], (1, KERNEL_SIZE), KERNEL_SIZE)          # conv_1 weight (1,1,20)->(1,20)
    bc = u(ks[1], (1, 1), KERNEL_SIZE)                    # conv_1 bias
    w1 = u(ks[2], (CONV_OUT_LEN, HIDDEN), CONV_OUT_LEN)   # fc_1 weight (transposed)
    b1 = u(ks[3], (1, HIDDEN), CONV_OUT_LEN)              # fc_1 bias
    w3 = u(ks[4], (HIDDEN, NUM_CLASSES), HIDDEN)          # fc_3 weight (transposed)
    b3 = u(ks[5], (1, NUM_CLASSES), HIDDEN)               # fc_3 bias
    return wc, bc, w1, b1, w3, b3


def reference_forward(x, params):
    """Pure-JAX f32 reference with the original (un-fused) two-stage math."""
    wc, bc, w1, b1, w3, b3 = params
    B = x.shape[0]
    xw = x.reshape(B, CONV_OUT_LEN, KERNEL_SIZE)
    conv = jnp.sum(xw * wc[0], axis=-1) + bc[0, 0]
    h = jnp.maximum(conv @ w1 + b1, 0.0)
    return h @ w3 + b3


if __name__ == "__main__":
    key = jax.random.PRNGKey(0)
    k_x, k_p = jax.random.split(key)

    B = 2
    x = jax.random.normal(k_x, (B, 1, SEQ_LEN), jnp.float32)
    params = init_params(k_p)

    out = oned_lenet_forward(x, params)
    out = jax.block_until_ready(out)

    ref = reference_forward(x, params)
    assert out.shape == (B, NUM_CLASSES)
    # bf16 inputs/weights + fused reduction order => looser tolerance vs f32 ref.
    assert jnp.allclose(out, ref, atol=5e-2, rtol=5e-2), float(
        jnp.max(jnp.abs(out - ref)))

    print("KERNEL_OK")
</pallas_src>

<mosaic_0001>
module attributes {stable_mosaic.version = 11 : i64} {
  func.func @lenet1d_kernel(%arg0: i32, %arg1: memref<8x1280xbf16, #tpu.memory_space<vmem>>, %arg2: memref<1280x128xbf16, #tpu.memory_space<vmem>>, %arg3: memref<1x128xf32, #tpu.memory_space<vmem>>, %arg4: memref<128x128xbf16, #tpu.memory_space<vmem>>, %arg5: memref<1x128xf32, #tpu.memory_space<vmem>>, %arg6: memref<8x128xf32, #tpu.memory_space<vmem>>) attributes {dimension_semantics = [#tpu.dimension_semantics<parallel>], iteration_bounds = array<i64: 1>, scalar_prefetch = 0 : i64, scratch_operands = 0 : i64, tpu.core_type = #tpu.core_type<tc>, window_params = [{transform_indices = @transform_0, window_bounds = array<i64: 8, 1280>}, {pipeline_mode = #tpu.pipeline_mode<synchronous>, transform_indices = @transform_1, window_bounds = array<i64: 1280, 128>}, {pipeline_mode = #tpu.pipeline_mode<synchronous>, transform_indices = @transform_2, window_bounds = array<i64: 1, 128>}, {pipeline_mode = #tpu.pipeline_mode<synchronous>, transform_indices = @transform_3, window_bounds = array<i64: 128, 128>}, {pipeline_mode = #tpu.pipeline_mode<synchronous>, transform_indices = @transform_4, window_bounds = array<i64: 1, 128>}, {transform_indices = @transform_5, window_bounds = array<i64: 8, 128>}]} {
    %c0 = arith.constant 0 : index
    %c0_0 = arith.constant 0 : index
    %0 = vector.load %arg1[%c0, %c0_0] : memref<8x1280xbf16, #tpu.memory_space<vmem>>, vector<8x1280xbf16>
    %c0_1 = arith.constant 0 : index
    %c0_2 = arith.constant 0 : index
    %1 = vector.load %arg2[%c0_1, %c0_2] : memref<1280x128xbf16, #tpu.memory_space<vmem>>, vector<1280x128xbf16>
    %cst = arith.constant dense<0.000000e+00> : vector<8x128xf32>
    %2 = tpu.matmul %0, %1, %cst {dimension_numbers = #tpu.dot_dimension_numbers<[1], [0], [0], [1], [0, 0, 1, 1], [], []>} : vector<8x1280xbf16>, vector<1280x128xbf16>, vector<8x128xf32> -> vector<8x128xf32>
    %c0_3 = arith.constant 0 : index
    %c0_4 = arith.constant 0 : index
    %3 = vector.load %arg3[%c0_3, %c0_4] : memref<1x128xf32, #tpu.memory_space<vmem>>, vector<1x128xf32>
    %4 = vector.broadcast %3 : vector<1x128xf32> to vector<8x128xf32>
    %5 = arith.addf %2, %4 : vector<8x128xf32>
    %cst_5 = arith.constant 0.000000e+00 : f32
    %6 = vector.broadcast %cst_5 : f32 to vector<8x128xf32>
    %7 = arith.maximumf %5, %6 : vector<8x128xf32>
    %8 = arith.truncf %7 : vector<8x128xf32> to vector<8x128xbf16>
    %c0_6 = arith.constant 0 : index
    %c0_7 = arith.constant 0 : index
    %9 = vector.load %arg4[%c0_6, %c0_7] : memref<128x128xbf16, #tpu.memory_space<vmem>>, vector<128x128xbf16>
    %cst_8 = arith.constant dense<0.000000e+00> : vector<8x128xf32>
    %10 = tpu.matmul %8, %9, %cst_8 {dimension_numbers = #tpu.dot_dimension_numbers<[1], [0], [0], [1], [0, 0, 1, 1], [], []>} : vector<8x128xbf16>, vector<128x128xbf16>, vector<8x128xf32> -> vector<8x128xf32>
    %c0_9 = arith.constant 0 : index
    %c0_10 = arith.constant 0 : index
    %11 = vector.load %arg5[%c0_9, %c0_10] : memref<1x128xf32, #tpu.memory_space<vmem>>, vector<1x128xf32>
    %12 = vector.broadcast %11 : vector<1x128xf32> to vector<8x128xf32>
    %13 = arith.addf %10, %12 : vector<8x128xf32>
    %c0_11 = arith.constant 0 : index
    %c0_12 = arith.constant 0 : index
    %14 = vector.load %arg6[%c0_11, %c0_12] : memref<8x128xf32, #tpu.memory_space<vmem>>, vector<8x128xf32>
    tpu.vector_store %arg6[%c0_11, %c0_12], %13 {strides = array<i32>} : memref<8x128xf32, #tpu.memory_space<vmem>>, vector<8x128xf32>,
    return
  }
  func.func @transform_0(%arg0: i32) -> (i32, i32) {
    %c0_i32 = arith.constant 0 : i32
    %c0_i32_0 = arith.constant 0 : i32
    return %arg0, %c0_i32 : i32, i32
  }
  func.func @transform_1(%arg0: i32) -> (i32, i32) {
    %c0_i32 = arith.constant 0 : i32
    %c0_i32_0 = arith.constant 0 : i32
    %c0_i32_1 = arith.constant 0 : i32
    return %c0_i32, %c0_i32_0 : i32, i32
  }
  func.func @transform_2(%arg0: i32) -> (i32, i32) {
    %c0_i32 = arith.constant 0 : i32
    %c0_i32_0 = arith.constant 0 : i32
    %c0_i32_1 = arith.constant 0 : i32
    return %c0_i32, %c0_i32_0 : i32, i32
  }
  func.func @transform_3(%arg0: i32) -> (i32, i32) {
    %c0_i32 = arith.constant 0 : i32
    %c0_i32_0 = arith.constant 0 : i32
    %c0_i32_1 = arith.constant 0 : i32
    return %c0_i32, %c0_i32_0 : i32, i32
  }
  func.func @transform_4(%arg0: i32) -> (i32, i32) {
    %c0_i32 = arith.constant 0 : i32
    %c0_i32_0 = arith.constant 0 : i32
    %c0_i32_1 = arith.constant 0 : i32
    return %c0_i32, %c0_i32_0 : i32, i32
  }
  func.func @transform_5(%arg0: i32) -> (i32, i32) {
    %c0_i32 = arith.constant 0 : i32
    %c0_i32_0 = arith.constant 0 : i32
    return %arg0, %c0_i32 : i32, i32
  }
}

</mosaic_0001>

<llo_original>
// kernel: oned_lenet_forward.1
$region0: #{oned_lenet_forward.1}
  #allocation0 [shape = 'u32[]', space=smem, size = 0x4, offset = 0x4, fixed_abs, tag = 'smem constant byte address 0x4 - core index']
  #allocation1 [shape = 'u32[72,128]{1,0:T(1,128)}', space=vmem, size = 0x9000, scoped, tag = 'internal scratch']
  %s0 = inlined_call_operand.vmem [shape: bf16[8,1280], index: 0, kind: input, shape index: {}]
  %s1 = inlined_call_operand.vmem [shape: bf16[1280,128], index: 1, kind: input, shape index: {}]
  %s2 = inlined_call_operand.vmem [shape: f32[1,128], index: 2, kind: input, shape index: {}]
  %s3 = inlined_call_operand.vmem [shape: bf16[128,128], index: 3, kind: input, shape index: {}]
  %s4 = inlined_call_operand.vmem [shape: f32[1,128], index: 4, kind: input, shape index: {}]
  %s5 = inlined_call_operand.vmem [shape: f32[8,128], index: 5, kind: output, shape index: {}]
  %s6 = sld [smem:[#allocation0]]
  $region30: #{oned_lenet_forward.1} parent=0
    _
  %s8 = ssub.s32 1, %s6
  %s9 = scalar_select 0, %s8, %s6
  // Predicated region
  $region2: #{oned_lenet_forward.1} parent=0 // pred_check
    _
  $region3: #{oned_lenet_forward.1} parent=0 // pred_check_branch
    %11 = sbr.rel (0) target = $region5
  $region4: #{oned_lenet_forward.1} parent=0 // pred_region
    _
  $region5: #{oned_lenet_forward.1} parent=0 // pred_fallthru
    _
  // Predicated region
  $region6: #{oned_lenet_forward.1} parent=0 // pred_check
    _
  $region7: #{oned_lenet_forward.1} parent=0 // pred_check_branch
    %13 = sbr.rel (0) target = $region9
  $region8: #{oned_lenet_forward.1} parent=0 // pred_region
    _
  $region9: #{oned_lenet_forward.1} parent=0 // pred_fallthru
    _
  // Predicated region
  $region10: #{oned_lenet_forward.1} parent=0 // pred_check
    _
  $region11: #{oned_lenet_forward.1} parent=0 // pred_check_branch
    %15 = sbr.rel (0) target = $region13
  $region12: #{oned_lenet_forward.1} parent=0 // pred_region
    _
  $region13: #{oned_lenet_forward.1} parent=0 // pred_fallthru
    _
  // Predicated region
  $region14: #{oned_lenet_forward.1} parent=0 // pred_check
    _
  $region15: #{oned_lenet_forward.1} parent=0 // pred_check_branch
    %17 = sbr.rel (0) target = $region17
  $region16: #{oned_lenet_forward.1} parent=0 // pred_region
    _
  $region17: #{oned_lenet_forward.1} parent=0 // pred_fallthru
    _
  // Predicated region
  $region18: #{oned_lenet_forward.1} parent=0 // pred_check
    _
  $region19: #{oned_lenet_forward.1} parent=0 // pred_check_branch
    %19 = sbr.rel (0) target = $region21
  $region20: #{oned_lenet_forward.1} parent=0 // pred_region
    _
  $region21: #{oned_lenet_forward.1} parent=0 // pred_fallthru
    _
  %v20 = vld [vmem:[%s0] sm:$0xff]
  %v21 = vld [vmem:[%s0 + $0x8] sm:$0xff]
  %v22 = vld [vmem:[%s0 + $0x10] sm:$0xff]
  %v23 = vld [vmem:[%s0 + $0x18] sm:$0xff]
  %v24 = vld [vmem:[%s0 + $0x20] sm:$0xff]
  %v25 = vld [vmem:[%s1] sm:$0xf]
  %v26 = vld [vmem:[%s1 + $0x4] sm:$0xf]
  %v27 = vld [vmem:[%s1 + $0x8] sm:$0xf]
  %v28 = vld [vmem:[%s1 + $0xc] sm:$0xf]
  %v29 = vld [vmem:[%s1 + $0x10] sm:$0xf]
  %v30 = vld [vmem:[%s1 + $0x14] sm:$0xf]
  %v31 = vld [vmem:[%s1 + $0x18] sm:$0xf]
  %v32 = vld [vmem:[%s1 + $0x1c] sm:$0xf]
  %v33 = vld [vmem:[%s1 + $0x20] sm:$0xf]
  %v34 = vld [vmem:[%s1 + $0x24] sm:$0xf]
  %v35 = vld [vmem:[%s1 + $0x28] sm:$0xf]
  %v36 = vld [vmem:[%s1 + $0x2c] sm:$0xf]
  %v37 = vld [vmem:[%s1 + $0x30] sm:$0xf]
  %v38 = vld [vmem:[%s1 + $0x34] sm:$0xf]
  %v39 = vld [vmem:[%s1 + $0x38] sm:$0xf]
  %v40 = vld [vmem:[%s1 + $0x3c] sm:$0xf]
  %v41 = vld [vmem:[%s1 + $0x40] sm:$0xf]
  %v42 = vld [vmem:[%s1 + $0x44] sm:$0xf]
  %v43 = vld [vmem:[%s1 + $0x48] sm:$0xf]
  %v44 = vld [vmem:[%s1 + $0x4c] sm:$0xf]
  %v45 = vld [vmem:[%s1 + $0x50] sm:$0xf]
  %v46 = vld [vmem:[%s1 + $0x54] sm:$0xf]
  %v47 = vld [vmem:[%s1 + $0x58] sm:$0xf]
  %v48 = vld [vmem:[%s1 + $0x5c] sm:$0xf]
  %v49 = vld [vmem:[%s1 + $0x60] sm:$0xf]
  %v50 = vld [vmem:[%s1 + $0x64] sm:$0xf]
  %v51 = vld [vmem:[%s1 + $0x68] sm:$0xf]
  %v52 = vld [vmem:[%s1 + $0x6c] sm:$0xf]
  %v53 = vld [vmem:[%s1 + $0x70] sm:$0xf]
  %v54 = vld [vmem:[%s1 + $0x74] sm:$0xf]
  %v55 = vld [vmem:[%s1 + $0x78] sm:$0xf]
  %v56 = vld [vmem:[%s1 + $0x7c] sm:$0xf]
  %v57 = vld [vmem:[%s1 + $0x80] sm:$0xf]
  %v58 = vld [vmem:[%s1 + $0x84] sm:$0xf]
  %v59 = vld [vmem:[%s1 + $0x88] sm:$0xf]
  %v60 = vld [vmem:[%s1 + $0x8c] sm:$0xf]
  %v61 = vld [vmem:[%s1 + $0x90] sm:$0xf]
  %v62 = vld [vmem:[%s1 + $0x94] sm:$0xf]
  %v63 = vld [vmem:[%s1 + $0x98] sm:$0xf]
  %v64 = vld [vmem:[%s1 + $0x9c] sm:$0xf]
  %v65 = vld [vmem:[%s1 + $0xa0] sm:$0xf]
  %v66 = vld [vmem:[%s1 + $0xa4] sm:$0xf]
  %v67 = vld [vmem:[%s1 + $0xa8] sm:$0xf]
  %v68 = vld [vmem:[%s1 + $0xac] sm:$0xf]
  %v69 = vld [vmem:[%s1 + $0xb0] sm:$0xf]
  %v70 = vld [vmem:[%s1 + $0xb4] sm:$0xf]
  %v71 = vld [vmem:[%s1 + $0xb8] sm:$0xf]
  %v72 = vld [vmem:[%s1 + $0xbc] sm:$0xf]
  %v73 = vld [vmem:[%s1 + $0xc0] sm:$0xf]
  %v74 = vld [vmem:[%s1 + $0xc4] sm:$0xf]
  %v75 = vld [vmem:[%s1 + $0xc8] sm:$0xf]
  %v76 = vld [vmem:[%s1 + $0xcc] sm:$0xf]
  %v77 = vld [vmem:[%s1 + $0xd0] sm:$0xf]
  %v78 = vld [vmem:[%s1 + $0xd4] sm:$0xf]
  %v79 = vld [vmem:[%s1 + $0xd8] sm:$0xf]
  %v80 = vld [vmem:[%s1 + $0xdc] sm:$0xf]
  %v81 = vld [vmem:[%s1 + $0xe0] sm:$0xf]
  %v82 = vld [vmem:[%s1 + $0xe4] sm:$0xf]
  %v83 = vld [vmem:[%s1 + $0xe8] sm:$0xf]
  %v84 = vld [vmem:[%s1 + $0xec] sm:$0xf]
  %v85 = vld [vmem:[%s1 + $0xf0] sm:$0xf]
  %v86 = vld [vmem:[%s1 + $0xf4] sm:$0xf]
  %v87 = vld [vmem:[%s1 + $0xf8] sm:$0xf]
  %v88 = vld [vmem:[%s1 + $0xfc] sm:$0xf]
  %v89 = vld [vmem:[%s1 + $0x100] sm:$0xf]
  %v90 = vld [vmem:[%s1 + $0x104] sm:$0xf]
  %v91 = vld [vmem:[%s1 + $0x108] sm:$0xf]
  %v92 = vld [vmem:[%s1 + $0x10c] sm:$0xf]
  %v93 = vld [vmem:[%s1 + $0x110] sm:$0xf]
  %v94 = vld [vmem:[%s1 + $0x114] sm:$0xf]
  %v95 = vld [vmem:[%s1 + $0x118] sm:$0xf]
  %v96 = vld [vmem:[%s1 + $0x11c] sm:$0xf]
  %v97 = vld [vmem:[%s1 + $0x120] sm:$0xf]
  %v98 = vld [vmem:[%s1 + $0x124] sm:$0xf]
  %v99 = vld [vmem:[%s1 + $0x128] sm:$0xf]
  %v100 = vld [vmem:[%s1 + $0x12c] sm:$0xf]
  %v101 = vld [vmem:[%s1 + $0x130] sm:$0xf]
  %v102 = vld [vmem:[%s1 + $0x134] sm:$0xf]
  %v103 = vld [vmem:[%s1 + $0x138] sm:$0xf]
  %v104 = vld [vmem:[%s1 + $0x13c] sm:$0xf]
  %v105 = vld [vmem:[%s1 + $0x140] sm:$0xf]
  %v106 = vld [vmem:[%s1 + $0x144] sm:$0xf]
  %v107 = vld [vmem:[%s1 + $0x148] sm:$0xf]
  %v108 = vld [vmem:[%s1 + $0x14c] sm:$0xf]
  %v109 = vld [vmem:[%s1 + $0x150] sm:$0xf]
  %v110 = vld [vmem:[%s1 + $0x154] sm:$0xf]
  %v111 = vld [vmem:[%s1 + $0x158] sm:$0xf]
  %v112 = vld [vmem:[%s1 + $0x15c] sm:$0xf]
  %v113 = vld [vmem:[%s1 + $0x160] sm:$0xf]
  %v114 = vld [vmem:[%s1 + $0x164] sm:$0xf]
  %v115 = vld [vmem:[%s1 + $0x168] sm:$0xf]
  %v116 = vld [vmem:[%s1 + $0x16c] sm:$0xf]
  %v117 = vld [vmem:[%s1 + $0x170] sm:$0xf]
  %v118 = vld [vmem:[%s1 + $0x174] sm:$0xf]
  %v119 = vld [vmem:[%s1 + $0x178] sm:$0xf]
  %v120 = vld [vmem:[%s1 + $0x17c] sm:$0xf]
  %v121 = vld [vmem:[%s1 + $0x180] sm:$0xf]
  %v122 = vld [vmem:[%s1 + $0x184] sm:$0xf]
  %v123 = vld [vmem:[%s1 + $0x188] sm:$0xf]
  %v124 = vld [vmem:[%s1 + $0x18c] sm:$0xf]
  %v125 = vld [vmem:[%s1 + $0x190] sm:$0xf]
  %v126 = vld [vmem:[%s1 + $0x194] sm:$0xf]
  %v127 = vld [vmem:[%s1 + $0x198] sm:$0xf]
  %v128 = vld [vmem:[%s1 + $0x19c] sm:$0xf]
  %v129 = vld [vmem:[%s1 + $0x1a0] sm:$0xf]
  %v130 = vld [vmem:[%s1 + $0x1a4] sm:$0xf]
  %v131 = vld [vmem:[%s1 + $0x1a8] sm:$0xf]
  %v132 = vld [vmem:[%s1 + $0x1ac] sm:$0xf]
  %v133 = vld [vmem:[%s1 + $0x1b0] sm:$0xf]
  %v134 = vld [vmem:[%s1 + $0x1b4] sm:$0xf]
  %v135 = vld [vmem:[%s1 + $0x1b8] sm:$0xf]
  %v136 = vld [vmem:[%s1 + $0x1bc] sm:$0xf]
  %v137 = vld [vmem:[%s1 + $0x1c0] sm:$0xf]
  %v138 = vld [vmem:[%s1 + $0x1c4] sm:$0xf]
  %v139 = vld [vmem:[%s1 + $0x1c8] sm:$0xf]
  %v140 = vld [vmem:[%s1 + $0x1cc] sm:$0xf]
  %v141 = vld [vmem:[%s1 + $0x1d0] sm:$0xf]
  %v142 = vld [vmem:[%s1 + $0x1d4] sm:$0xf]
  %v143 = vld [vmem:[%s1 + $0x1d8] sm:$0xf]
  %v144 = vld [vmem:[%s1 + $0x1dc] sm:$0xf]
  %v145 = vld [vmem:[%s1 + $0x1e0] sm:$0xf]
  %v146 = vld [vmem:[%s1 + $0x1e4] sm:$0xf]
  %v147 = vld [vmem:[%s1 + $0x1e8] sm:$0xf]
  %v148 = vld [vmem:[%s1 + $0x1ec] sm:$0xf]
  %v149 = vld [vmem:[%s1 + $0x1f0] sm:$0xf]
  %v150 = vld [vmem:[%s1 + $0x1f4] sm:$0xf]
  %v151 = vld [vmem:[%s1 + $0x1f8] sm:$0xf]
  %v152 = vld [vmem:[%s1 + $0x1fc] sm:$0xf]
  %v153 = vld [vmem:[%s1 + $0x200] sm:$0xf]
  %v154 = vld [vmem:[%s1 + $0x204] sm:$0xf]
  %v155 = vld [vmem:[%s1 + $0x208] sm:$0xf]
  %v156 = vld [vmem:[%s1 + $0x20c] sm:$0xf]
  %v157 = vld [vmem:[%s1 + $0x210] sm:$0xf]
  %v158 = vld [vmem:[%s1 + $0x214] sm:$0xf]
  %v159 = vld [vmem:[%s1 + $0x218] sm:$0xf]
  %v160 = vld [vmem:[%s1 + $0x21c] sm:$0xf]
  %v161 = vld [vmem:[%s1 + $0x220] sm:$0xf]
  %v162 = vld [vmem:[%s1 + $0x224] sm:$0xf]
  %v163 = vld [vmem:[%s1 + $0x228] sm:$0xf]
  %v164 = vld [vmem:[%s1 + $0x22c] sm:$0xf]
  %v165 = vld [vmem:[%s1 + $0x230] sm:$0xf]
  %v166 = vld [vmem:[%s1 + $0x234] sm:$0xf]
  %v167 = vld [vmem:[%s1 + $0x238] sm:$0xf]
  %v168 = vld [vmem:[%s1 + $0x23c] sm:$0xf]
  %v169 = vld [vmem:[%s1 + $0x240] sm:$0xf]
  %v170 = vld [vmem:[%s1 + $0x244] sm:$0xf]
  %v171 = vld [vmem:[%s1 + $0x248] sm:$0xf]
  %v172 = vld [vmem:[%s1 + $0x24c] sm:$0xf]
  %v173 = vld [vmem:[%s1 + $0x250] sm:$0xf]
  %v174 = vld [vmem:[%s1 + $0x254] sm:$0xf]
  %v175 = vld [vmem:[%s1 + $0x258] sm:$0xf]
  %v176 = vld [vmem:[%s1 + $0x25c] sm:$0xf]
  %v177 = vld [vmem:[%s1 + $0x260] sm:$0xf]
  %v178 = vld [vmem:[%s1 + $0x264] sm:$0xf]
  %v179 = vld [vmem:[%s1 + $0x268] sm:$0xf]
  %v180 = vld [vmem:[%s1 + $0x26c] sm:$0xf]
  %v181 = vld [vmem:[%s1 + $0x270] sm:$0xf]
  %v182 = vld [vmem:[%s1 + $0x274] sm:$0xf]
  %v183 = vld [vmem:[%s1 + $0x278] sm:$0xf]
  %v184 = vld [vmem:[%s1 + $0x27c] sm:$0xf]
  %v185 = vld [vmem:[%s2] sm:$0x1]
  %v187 = vperm.slane %v185, 0
  %v194 = vunpack.c.l.b16 %v20
  %v195 = vunpack.c.h.b16 %v20
  %v196 = vunpack.c.l.b16 %v21
  %v197 = vunpack.c.h.b16 %v21
  %v198 = vunpack.c.l.b16 %v22
  %v199 = vunpack.c.h.b16 %v22
  %v200 = vunpack.c.l.b16 %v23
  %v201 = vunpack.c.h.b16 %v23
  %v202 = vunpack.c.l.b16 %v24
  %v203 = vunpack.c.h.b16 %v24
  %v204 = vpack.c.b16 %v194, %v194
  %v205 = vpack.c.b16 %v195, %v195
  %v206 = vpack.c.b16 %v196, %v196
  %v207 = vpack.c.b16 %v197, %v197
  %v208 = vpack.c.b16 %v198, %v198
  %v209 = vpack.c.b16 %v199, %v199
  %v210 = vpack.c.b16 %v200, %v200
  %v211 = vpack.c.b16 %v201, %v201
  %v212 = vpack.c.b16 %v202, %v202
  %v213 = vpack.c.b16 %v203, %v203
  %v384 = vunpack.c.l.b16 %v25
  %v385 = vunpack.c.l.b16 %v26
  %v386 = vunpack.c.l.b16 %v27
  %v387 = vunpack.c.l.b16 %v28
  %v388 = vunpack.c.l.b16 %v29
  %v389 = vunpack.c.l.b16 %v30
  %v390 = vunpack.c.l.b16 %v31
  %v391 = vunpack.c.l.b16 %v32
  %v392 = vunpack.c.l.b16 %v33
  %v393 = vunpack.c.l.b16 %v34
  %v394 = vunpack.c.l.b16 %v35
  %v395 = vunpack.c.l.b16 %v36
  %v396 = vunpack.c.l.b16 %v37
  %v397 = vunpack.c.l.b16 %v38
  %v398 = vunpack.c.l.b16 %v39
  %v399 = vunpack.c.l.b16 %v40
  %v400 = vunpack.c.l.b16 %v41
  %v401 = vunpack.c.l.b16 %v42
  %v402 = vunpack.c.l.b16 %v43
  %v403 = vunpack.c.l.b16 %v44
  %v404 = vunpack.c.l.b16 %v45
  %v405 = vunpack.c.l.b16 %v46
  %v406 = vunpack.c.l.b16 %v47
  %v407 = vunpack.c.l.b16 %v48
  %v408 = vunpack.c.l.b16 %v49
  %v409 = vunpack.c.l.b16 %v50
  %v410 = vunpack.c.l.b16 %v51
  %v411 = vunpack.c.l.b16 %v52
  %v412 = vunpack.c.l.b16 %v53
  %v413 = vunpack.c.l.b16 %v54
  %v414 = vunpack.c.l.b16 %v55
  %v415 = vunpack.c.l.b16 %v56
  %v416 = vunpack.c.l.b16 %v57
  %v417 = vunpack.c.l.b16 %v58
  %v418 = vunpack.c.l.b16 %v59
  %v419 = vunpack.c.l.b16 %v60
  %v420 = vunpack.c.l.b16 %v61
  %v421 = vunpack.c.l.b16 %v62
  %v422 = vunpack.c.l.b16 %v63
  %v423 = vunpack.c.l.b16 %v64
  %v424 = vunpack.c.l.b16 %v65
  %v425 = vunpack.c.l.b16 %v66
  %v426 = vunpack.c.l.b16 %v67
  %v427 = vunpack.c.l.b16 %v68
  %v428 = vunpack.c.l.b16 %v69
  %v429 = vunpack.c.l.b16 %v70
  %v430 = vunpack.c.l.b16 %v71
  %v431 = vunpack.c.l.b16 %v72
  %v432 = vunpack.c.l.b16 %v73
  %v433 = vunpack.c.l.b16 %v74
  %v434 = vunpack.c.l.b16 %v75
  %v435 = vunpack.c.l.b16 %v76
  %v436 = vunpack.c.l.b16 %v77
  %v437 = vunpack.c.l.b16 %v78
  %v438 = vunpack.c.l.b16 %v79
  %v439 = vunpack.c.l.b16 %v80
  %v440 = vunpack.c.l.b16 %v81
  %v441 = vunpack.c.l.b16 %v82
  %v442 = vunpack.c.l.b16 %v83
  %v443 = vunpack.c.l.b16 %v84
  %v444 = vunpack.c.l.b16 %v85
  %v445 = vunpack.c.l.b16 %v86
  %v446 = vunpack.c.l.b16 %v87
  %v447 = vunpack.c.l.b16 %v88
  %v448 = vunpack.c.l.b16 %v89
  %v449 = vunpack.c.l.b16 %v90
  %v450 = vunpack.c.l.b16 %v91
  %v451 = vunpack.c.l.b16 %v92
  %v452 = vunpack.c.l.b16 %v93
  %v453 = vunpack.c.l.b16 %v94
  %v454 = vunpack.c.l.b16 %v95
  %v455 = vunpack.c.l.b16 %v96
  %v456 = vunpack.c.l.b16 %v97
  %v457 = vunpack.c.l.b16 %v98
  %v458 = vunpack.c.l.b16 %v99
  %v459 = vunpack.c.l.b16 %v100
  %v460 = vunpack.c.l.b16 %v101
  %v461 = vunpack.c.l.b16 %v102
  %v462 = vunpack.c.l.b16 %v103
  %v463 = vunpack.c.l.b16 %v104
  %v464 = vunpack.c.l.b16 %v105
  %v465 = vunpack.c.l.b16 %v106
  %v466 = vunpack.c.l.b16 %v107
  %v467 = vunpack.c.l.b16 %v108
  %v468 = vunpack.c.l.b16 %v109
  %v469 = vunpack.c.l.b16 %v110
  %v470 = vunpack.c.l.b16 %v111
  %v471 = vunpack.c.l.b16 %v112
  %v472 = vunpack.c.l.b16 %v113
  %v473 = vunpack.c.l.b16 %v114
  %v474 = vunpack.c.l.b16 %v115
  %v475 = vunpack.c.l.b16 %v116
  %v476 = vunpack.c.l.b16 %v117
  %v477 = vunpack.c.l.b16 %v118
  %v478 = vunpack.c.l.b16 %v119
  %v479 = vunpack.c.l.b16 %v120
  %v480 = vunpack.c.l.b16 %v121
  %v481 = vunpack.c.l.b16 %v122
  %v482 = vunpack.c.l.b16 %v123
  %v483 = vunpack.c.l.b16 %v124
  %v484 = vunpack.c.l.b16 %v125
  %v485 = vunpack.c.l.b16 %v126
  %v486 = vunpack.c.l.b16 %v127
  %v487 = vunpack.c.l.b16 %v128
  %v488 = vunpack.c.l.b16 %v129
  %v489 = vunpack.c.l.b16 %v130
  %v490 = vunpack.c.l.b16 %v131
  %v491 = vunpack.c.l.b16 %v132
  %v492 = vunpack.c.l.b16 %v133
  %v493 = vunpack.c.l.b16 %v134
  %v494 = vunpack.c.l.b16 %v135
  %v495 = vunpack.c.l.b16 %v136
  %v496 = vunpack.c.l.b16 %v137
  %v497 = vunpack.c.l.b16 %v138
  %v498 = vunpack.c.l.b16 %v139
  %v499 = vunpack.c.l.b16 %v140
  %v500 = vunpack.c.l.b16 %v141
  %v501 = vunpack.c.l.b16 %v142
  %v502 = vunpack.c.l.b16 %v143
  %v503 = vunpack.c.l.b16 %v144
  %v504 = vunpack.c.l.b16 %v145
  %v505 = vunpack.c.l.b16 %v146
  %v506 = vunpack.c.l.b16 %v147
  %v507 = vunpack.c.l.b16 %v148
  %v508 = vunpack.c.l.b16 %v149
  %v509 = vunpack.c.l.b16 %v150
  %v510 = vunpack.c.l.b16 %v151
  %v511 = vunpack.c.l.b16 %v152
  %v512 = vunpack.c.l.b16 %v153
  %v513 = vunpack.c.l.b16 %v154
  %v514 = vunpack.c.l.b16 %v155
  %v515 = vunpack.c.l.b16 %v156
  %v516 = vunpack.c.l.b16 %v157
  %v517 = vunpack.c.l.b16 %v158
  %v518 = vunpack.c.l.b16 %v159
  %v519 = vunpack.c.l.b16 %v160
  %v520 = vunpack.c.l.b16 %v161
  %v521 = vunpack.c.l.b16 %v162
  %v522 = vunpack.c.l.b16 %v163
  %v523 = vunpack.c.l.b16 %v164
  %v524 = vunpack.c.l.b16 %v165
  %v525 = vunpack.c.l.b16 %v166
  %v526 = vunpack.c.l.b16 %v167
  %v527 = vunpack.c.l.b16 %v168
  %v528 = vunpack.c.l.b16 %v169
  %v529 = vunpack.c.l.b16 %v170
  %v530 = vunpack.c.l.b16 %v171
  %v531 = vunpack.c.l.b16 %v172
  %v532 = vunpack.c.l.b16 %v173
  %v533 = vunpack.c.l.b16 %v174
  %v534 = vunpack.c.l.b16 %v175
  %v535 = vunpack.c.l.b16 %v176
  %v536 = vunpack.c.l.b16 %v177
  %v537 = vunpack.c.l.b16 %v178
  %v538 = vunpack.c.l.b16 %v179
  %v539 = vunpack.c.l.b16 %v180
  %v540 = vunpack.c.l.b16 %v181
  %v541 = vunpack.c.l.b16 %v182
  %v542 = vunpack.c.l.b16 %v183
  %v543 = vunpack.c.l.b16 %v184
  %v544 = vpack.c.b16 %v385, %v384
  %v545 = vpack.c.b16 %v387, %v386
  %v546 = vpack.c.b16 %v389, %v388
  %v547 = vpack.c.b16 %v391, %v390
  %v548 = vpack.c.b16 %v393, %v392
  %v549 = vpack.c.b16 %v395, %v394
  %v550 = vpack.c.b16 %v397, %v396
  %v551 = vpack.c.b16 %v399, %v398
  %v552 = vpack.c.b16 %v401, %v400
  %v553 = vpack.c.b16 %v403, %v402
  %v554 = vpack.c.b16 %v405, %v404
  %v555 = vpack.c.b16 %v407, %v406
  %v556 = vpack.c.b16 %v409, %v408
  %v557 = vpack.c.b16 %v411, %v410
  %v558 = vpack.c.b16 %v413, %v412
  %v559 = vpack.c.b16 %v415, %v414
  %v560 = vpack.c.b16 %v417, %v416
  %v561 = vpack.c.b16 %v419, %v418
  %v562 = vpack.c.b16 %v421, %v420
  %v563 = vpack.c.b16 %v423, %v422
  %v564 = vpack.c.b16 %v425, %v424
  %v565 = vpack.c.b16 %v427, %v426
  %v566 = vpack.c.b16 %v429, %v428
  %v567 = vpack.c.b16 %v431, %v430
  %v568 = vpack.c.b16 %v433, %v432
  %v569 = vpack.c.b16 %v435, %v434
  %v570 = vpack.c.b16 %v437, %v436
  %v571 = vpack.c.b16 %v439, %v438
  %v572 = vpack.c.b16 %v441, %v440
  %v573 = vpack.c.b16 %v443, %v442
  %v574 = vpack.c.b16 %v445, %v444
  %v575 = vpack.c.b16 %v447, %v446
  %v576 = vpack.c.b16 %v449, %v448
  %v577 = vpack.c.b16 %v451, %v450
  %v578 = vpack.c.b16 %v453, %v452
  %v579 = vpack.c.b16 %v455, %v454
  %v580 = vpack.c.b16 %v457, %v456
  %v581 = vpack.c.b16 %v459, %v458
  %v582 = vpack.c.b16 %v461, %v460
  %v583 = vpack.c.b16 %v463, %v462
  %v584 = vpack.c.b16 %v465, %v464
  %v585 = vpack.c.b16 %v467, %v466
  %v586 = vpack.c.b16 %v469, %v468
  %v587 = vpack.c.b16 %v471, %v470
  %v588 = vpack.c.b16 %v473, %v472
  %v589 = vpack.c.b16 %v475, %v474
  %v590 = vpack.c.b16 %v477, %v476
  %v591 = vpack.c.b16 %v479, %v478
  %v592 = vpack.c.b16 %v481, %v480
  %v593 = vpack.c.b16 %v483, %v482
  %v594 = vpack.c.b16 %v485, %v484
  %v595 = vpack.c.b16 %v487, %v486
  %v596 = vpack.c.b16 %v489, %v488
  %v597 = vpack.c.b16 %v491, %v490
  %v598 = vpack.c.b16 %v493, %v492
  %v599 = vpack.c.b16 %v495, %v494
  %v600 = vpack.c.b16 %v497, %v496
  %v601 = vpack.c.b16 %v499, %v498
  %v602 = vpack.c.b16 %v501, %v500
  %v603 = vpack.c.b16 %v503, %v502
  %v604 = vpack.c.b16 %v505, %v504
  %v605 = vpack.c.b16 %v507, %v506
  %v606 = vpack.c.b16 %v509, %v508
  %v607 = vpack.c.b16 %v511, %v510
  %v608 = vpack.c.b16 %v513, %v512
  %v609 = vpack.c.b16 %v515, %v514
  %v610 = vpack.c.b16 %v517, %v516
  %v611 = vpack.c.b16 %v519, %v518
  %v612 = vpack.c.b16 %v521, %v520
  %v613 = vpack.c.b16 %v523, %v522
  %v614 = vpack.c.b16 %v525, %v524
  %v615 = vpack.c.b16 %v527, %v526
  %v616 = vpack.c.b16 %v529, %v528
  %v617 = vpack.c.b16 %v531, %v530
  %v618 = vpack.c.b16 %v533, %v532
  %v619 = vpack.c.b16 %v535, %v534
  %v620 = vpack.c.b16 %v537, %v536
  %v621 = vpack.c.b16 %v539, %v538
  %v622 = vpack.c.b16 %v541, %v540
  %v623 = vpack.c.b16 %v543, %v542
  %704 = vmatpush.bf16.msra.mxu0 %v551
  %705 = vmatpush.bf16.msra.mxu0 %v550
  %706 = vmatpush.bf16.msra.mxu0 %v549
  %707 = vmatpush.bf16.msra.mxu0 %v548
  %708 = vmatpush.bf16.msra.mxu0 %v547
  %709 = vmatpush.bf16.msra.mxu0 %v546
  %710 = vmatpush.bf16.msra.mxu0 %v545
  %711 = vmatpush.bf16.msra.mxu0 %v544
  %712 = vmatmul.bf16.gmra.mxu0 %v204
  %v713 = vpop.f32.mrf.mxu0
  %v714 = vadd.f32 %v187, %v713
  %v715 = vpop.f32.mrf.mxu0
  %716 = vdwg.mxu0
  %717 = vmatpush.bf16.msra.mxu0 %v559
  %718 = vmatpush.bf16.msra.mxu0 %v558
  %719 = vmatpush.bf16.msra.mxu0 %v557
  %720 = vmatpush.bf16.msra.mxu0 %v556
  %721 = vmatpush.bf16.msra.mxu0 %v555
  %722 = vmatpush.bf16.msra.mxu0 %v554
  %723 = vmatpush.bf16.msra.mxu0 %v553
  %724 = vmatpush.bf16.msra.mxu0 %v552
  %725 = vmatmul.bf16.gmra.mxu0 %v205
  %v726 = vpop.f32.mrf.mxu0
  %v727 = vadd.f32 %v714, %v726
  %v728 = vpop.f32.mrf.mxu0
  %729 = vdwg.mxu0
  %730 = vmatpush.bf16.msra.mxu0 %v567
  %731 = vmatpush.bf16.msra.mxu0 %v566
  %732 = vmatpush.bf16.msra.mxu0 %v565
  %733 = vmatpush.bf16.msra.mxu0 %v564
  %734 = vmatpush.bf16.msra.mxu0 %v563
  %735 = vmatpush.bf16.msra.mxu0 %v562
  %736 = vmatpush.bf16.msra.mxu0 %v561
  %737 = vmatpush.bf16.msra.mxu0 %v560
  %738 = vmatmul.bf16.gmra.mxu0 %v206
  %v739 = vpop.f32.mrf.mxu0
  %v740 = vadd.f32 %v727, %v739
  %v741 = vpop.f32.mrf.mxu0
  %742 = vdwg.mxu0
  %743 = vmatpush.bf16.msra.mxu0 %v575
  %744 = vmatpush.bf16.msra.mxu0 %v574
  %745 = vmatpush.bf16.msra.mxu0 %v573
  %746 = vmatpush.bf16.msra.mxu0 %v572
  %747 = vmatpush.bf16.msra.mxu0 %v571
  %748 = vmatpush.bf16.msra.mxu0 %v570
  %749 = vmatpush.bf16.msra.mxu0 %v569
  %750 = vmatpush.bf16.msra.mxu0 %v568
  %751 = vmatmul.bf16.gmra.mxu0 %v207
  %v752 = vpop.f32.mrf.mxu0
  %v753 = vadd.f32 %v740, %v752
  %v754 = vpop.f32.mrf.mxu0
  %755 = vdwg.mxu0
  %756 = vmatpush.bf16.msra.mxu0 %v583
  %757 = vmatpush.bf16.msra.mxu0 %v582
  %758 = vmatpush.bf16.msra.mxu0 %v581
  %759 = vmatpush.bf16.msra.mxu0 %v580
  %760 = vmatpush.bf16.msra.mxu0 %v579
  %761 = vmatpush.bf16.msra.mxu0 %v578
  %762 = vmatpush.bf16.msra.mxu0 %v577
  %763 = vmatpush.bf16.msra.mxu0 %v576
  %764 = vmatmul.bf16.gmra.mxu0 %v208
  %v765 = vpop.f32.mrf.mxu0
  %v766 = vadd.f32 %v753, %v765
  %v767 = vpop.f32.mrf.mxu0
  %768 = vdwg.mxu0
  %769 = vmatpush.bf16.msra.mxu0 %v591
  %770 = vmatpush.bf16.msra.mxu0 %v590
  %771 = vmatpush.bf16.msra.mxu0 %v589
  %772 = vmatpush.bf16.msra.mxu0 %v588
  %773 = vmatpush.bf16.msra.mxu0 %v587
  %774 = vmatpush.bf16.msra.mxu0 %v586
  %775 = vmatpush.bf16.msra.mxu0 %v585
  %776 = vmatpush.bf16.msra.mxu0 %v584
  %777 = vmatmul.bf16.gmra.mxu0 %v209
  %v778 = vpop.f32.mrf.mxu0
  %v779 = vadd.f32 %v766, %v778
  %v780 = vpop.f32.mrf.mxu0
  %781 = vdwg.mxu0
  %782 = vmatpush.bf16.msra.mxu0 %v599
  %783 = vmatpush.bf16.msra.mxu0 %v598
  %784 = vmatpush.bf16.msra.mxu0 %v597
  %785 = vmatpush.bf16.msra.mxu0 %v596
  %786 = vmatpush.bf16.msra.mxu0 %v595
  %787 = vmatpush.bf16.msra.mxu0 %v594
  %788 = vmatpush.bf16.msra.mxu0 %v593
  %789 = vmatpush.bf16.msra.mxu0 %v592
  %790 = vmatmul.bf16.gmra.mxu0 %v210
  %v791 = vpop.f32.mrf.mxu0
  %v792 = vadd.f32 %v779, %v791
  %v793 = vpop.f32.mrf.mxu0
  %794 = vdwg.mxu0
  %795 = vmatpush.bf16.msra.mxu0 %v607
  %796 = vmatpush.bf16.msra.mxu0 %v606
  %797 = vmatpush.bf16.msra.mxu0 %v605
  %798 = vmatpush.bf16.msra.mxu0 %v604
  %799 = vmatpush.bf16.msra.mxu0 %v603
  %800 = vmatpush.bf16.msra.mxu0 %v602
  %801 = vmatpush.bf16.msra.mxu0 %v601
  %802 = vmatpush.bf16.msra.mxu0 %v600
  %803 = vmatmul.bf16.gmra.mxu0 %v211
  %v804 = vpop.f32.mrf.mxu0
  %v805 = vadd.f32 %v792, %v804
  %v806 = vpop.f32.mrf.mxu0
  %807 = vdwg.mxu0
  %808 = vmatpush.bf16.msra.mxu0 %v615
  %809 = vmatpush.bf16.msra.mxu0 %v614
  %810 = vmatpush.bf16.msra.mxu0 %v613
  %811 = vmatpush.bf16.msra.mxu0 %v612
  %812 = vmatpush.bf16.msra.mxu0 %v611
  %813 = vmatpush.bf16.msra.mxu0 %v610
  %814 = vmatpush.bf16.msra.mxu0 %v609
  %815 = vmatpush.bf16.msra.mxu0 %v608
  %816 = vmatmul.bf16.gmra.mxu0 %v212
  %v817 = vpop.f32.mrf.mxu0
  %v818 = vadd.f32 %v805, %v817
  %v819 = vpop.f32.mrf.mxu0
  %820 = vdwg.mxu0
  %821 = vmatpush.bf16.msra.mxu0 %v623
  %822 = vmatpush.bf16.msra.mxu0 %v622
  %823 = vmatpush.bf16.msra.mxu0 %v621
  %824 = vmatpush.bf16.msra.mxu0 %v620
  %825 = vmatpush.bf16.msra.mxu0 %v619
  %826 = vmatpush.bf16.msra.mxu0 %v618
  %827 = vmatpush.bf16.msra.mxu0 %v617
  %828 = vmatpush.bf16.msra.mxu0 %v616
  %829 = vmatmul.bf16.gmra.mxu0 %v213
  %v830 = vpop.f32.mrf.mxu0
  %v831 = vadd.f32 %v818, %v830
  %v832 = vpop.f32.mrf.mxu0
  %833 = vdwg.mxu0
  %v834 = vmax.f32 %v831, 0.0
  %v835 = vpack.c.bf16 %v834, %v834
  %v836 = vld [vmem:[%s3] sm:$0xf]
  %v837 = vld [vmem:[%s3 + $0x4] sm:$0xf]
  %v838 = vld [vmem:[%s3 + $0x8] sm:$0xf]
  %v839 = vld [vmem:[%s3 + $0xc] sm:$0xf]
  %v840 = vld [vmem:[%s3 + $0x10] sm:$0xf]
  %v841 = vld [vmem:[%s3 + $0x14] sm:$0xf]
  %v842 = vld [vmem:[%s3 + $0x18] sm:$0xf]
  %v843 = vld [vmem:[%s3 + $0x1c] sm:$0xf]
  %v844 = vld [vmem:[%s3 + $0x20] sm:$0xf]
  %v845 = vld [vmem:[%s3 + $0x24] sm:$0xf]
  %v846 = vld [vmem:[%s3 + $0x28] sm:$0xf]
  %v847 = vld [vmem:[%s3 + $0x2c] sm:$0xf]
  %v848 = vld [vmem:[%s3 + $0x30] sm:$0xf]
  %v849 = vld [vmem:[%s3 + $0x34] sm:$0xf]
  %v850 = vld [vmem:[%s3 + $0x38] sm:$0xf]
  %v851 = vld [vmem:[%s3 + $0x3c] sm:$0xf]
  %v852 = vld [vmem:[%s4] sm:$0x1]
  %v854 = vperm.slane %v852, 0
  %v872 = vunpack.c.l.b16 %v836
  %v873 = vunpack.c.l.b16 %v837
  %v874 = vunpack.c.l.b16 %v838
  %v875 = vunpack.c.l.b16 %v839
  %v876 = vunpack.c.l.b16 %v840
  %v877 = vunpack.c.l.b16 %v841
  %v878 = vunpack.c.l.b16 %v842
  %v879 = vunpack.c.l.b16 %v843
  %v880 = vunpack.c.l.b16 %v844
  %v881 = vunpack.c.l.b16 %v845
  %v882 = vunpack.c.l.b16 %v846
  %v883 = vunpack.c.l.b16 %v847
  %v884 = vunpack.c.l.b16 %v848
  %v885 = vunpack.c.l.b16 %v849
  %v886 = vunpack.c.l.b16 %v850
  %v887 = vunpack.c.l.b16 %v851
  %v888 = vpack.c.b16 %v873, %v872
  %v889 = vpack.c.b16 %v875, %v874
  %v890 = vpack.c.b16 %v877, %v876
  %v891 = vpack.c.b16 %v879, %v878
  %v892 = vpack.c.b16 %v881, %v880
  %v893 = vpack.c.b16 %v883, %v882
  %v894 = vpack.c.b16 %v885, %v884
  %v895 = vpack.c.b16 %v887, %v886
  %904 = vmatpush.bf16.msra.mxu0 %v895
  %905 = vmatpush.bf16.msra.mxu0 %v894
  %906 = vmatpush.bf16.msra.mxu0 %v893
  %907 = vmatpush.bf16.msra.mxu0 %v892
  %908 = vmatpush.bf16.msra.mxu0 %v891
  %909 = vmatpush.bf16.msra.mxu0 %v890
  %910 = vmatpush.bf16.msra.mxu0 %v889
  %911 = vmatpush.bf16.msra.mxu0 %v888
  %912 = vmatmul.bf16.gmra.mxu0 %v835
  %v913 = vpop.f32.mrf.mxu0
  %v914 = vadd.f32 %v854, %v913
  %v915 = vpop.f32.mrf.mxu0
  %916 = vdwg.mxu0
  %917 = vst [vmem:[%s5] sm:$0xff] %v914
  // Predicated region
  $region22: #{oned_lenet_forward.1} parent=0 // pred_check
    _
  $region23: #{oned_lenet_forward.1} parent=0 // pred_check_branch
    %919 = sbr.rel (0) target = $region25
  $region24: #{oned_lenet_forward.1} parent=0 // pred_region
    _
  $region25: #{oned_lenet_forward.1} parent=0 // pred_fallthru
    _
  // Predicated region
  $region26: #{oned_lenet_forward.1} parent=0 // pred_check
    _
  $region27: #{oned_lenet_forward.1} parent=0 // pred_check_branch
    %921 = sbr.rel (0) target = $region29
  $region28: #{oned_lenet_forward.1} parent=0 // pred_region
    _
  $region29: #{oned_lenet_forward.1} parent=0 // pred_fallthru
    _

</llo_original>
